<compile_context>
chip_gen: v7x
topology: tpu7x:2x2x1
jax: 0.10.0
libtpu: 0.0.40
codegen_flags: <defaults>
</compile_context>

<pallas_src>
import numpy as np
import jax
import jax.numpy as jnp
from jax.experimental import pallas as pl
from jax.experimental.pallas import tpu as pltpu


# ----------------------------- host-side matrix builders -----------------------------

def _round_up(v, m):
    return -(-v // m) * m


def adaptive_pool_matrix(out_size, in_size):
    """Row-stochastic matrix reproducing nn.AdaptiveAvgPool2d bins (1-D factor)."""
    P = np.zeros((out_size, in_size), dtype=np.float64)
    for i in range(out_size):
        start = (i * in_size) // out_size
        end = -((-(i + 1) * in_size) // out_size)  # ceil((i+1)*in/out)
        P[i, start:end] = 1.0 / (end - start)
    return P


def bilinear_upsample_matrix(out_size, in_size):
    """1-D factor of F.interpolate(mode='bilinear', align_corners=True)."""
    A = np.zeros((out_size, in_size), dtype=np.float64)
    if in_size == 1:
        A[:, 0] = 1.0
        return A
    scale = (in_size - 1) / (out_size - 1) if out_size > 1 else 0.0
    for o in range(out_size):
        src = o * scale
        i0 = min(int(np.floor(src)), in_size - 1)
        i1 = min(i0 + 1, in_size - 1)
        frac = src - i0
        A[o, i0] += 1.0 - frac
        A[o, i1] += frac
    return A


def build_ppm_matrices(bins, H, W, dtype=jnp.bfloat16):
    """Stacked, lane-padded pooling / upsample matrices for all bins (built once)."""
    HW = H * W
    HWp = _round_up(HW, 128)
    b2sum = sum(b * b for b in bins)
    B2P = _round_up(b2sum, 128)
    mpoolT = np.zeros((HWp, B2P), dtype=np.float64)   # (HWp, B2P), zero-padded
    mupT = np.zeros((B2P, HWp), dtype=np.float64)     # (B2P, HWp), zero-padded
    col = 0
    for b in bins:
        ph = adaptive_pool_matrix(b, H)
        pw = adaptive_pool_matrix(b, W)
        ah = bilinear_upsample_matrix(H, b)
        aw = bilinear_upsample_matrix(W, b)
        b2 = b * b
        mpoolT[:HW, col:col + b2] = np.kron(ph, pw).T      # (HW, b^2)
        mupT[col:col + b2, :HW] = np.kron(ah, aw).T        # (b^2, HW)
        col += b2
    return jnp.asarray(mpoolT, dtype=dtype), jnp.asarray(mupT, dtype=dtype)


def build_block_diag_mask(bins, R):
    """0/1 mask (nbins*R, B2P) selecting each bin's own pooled columns."""
    b2sum = sum(b * b for b in bins)
    B2P = _round_up(b2sum, 128)
    m = np.zeros((len(bins) * R, B2P), dtype=np.float32)
    col = 0
    for i, b in enumerate(bins):
        b2 = b * b
        m[i * R:(i + 1) * R, col:col + b2] = 1.0
        col += b2
    return jnp.asarray(m)


def fold_params(params):
    """Fold BN scale into the 1x1-conv weight; stack all bins."""
    w_scaled = jnp.concatenate(
        [p["w"] * p["scale"][:, None] for p in params], axis=0
    ).astype(jnp.bfloat16)                                        # (nbins*R, C)
    shift = jnp.concatenate([p["shift"] for p in params], axis=0)
    shift = shift.reshape(-1, 1).astype(jnp.float32)              # (nbins*R, 1)
    return w_scaled, shift


def _vmem_limit_bytes():
    """Generation-aware VMEM limit (~85% of physical, capped below 128 MiB parts)."""
    cap = 128 * 1024 * 1024
    try:
        cap = int(getattr(pltpu.get_tpu_info(), "vmem_capacity_bytes", cap))
    except Exception:
        pass
    return int(min(cap * 85 // 100, 110 * 1024 * 1024))


# ----------------------------------- Pallas kernels -----------------------------------

def _make_fused_kernel(C):
    """Single-call path: whole HW resident, x read from HBM exactly once."""
    def kernel(x_ref, mpoolT_ref, w_ref, shift_ref, mask_ref, mupT_ref, o_ref):
        x = x_ref[0]                                            # (C, HWp) bf16
        o_ref[0, :C, :] = x.astype(o_ref.dtype)                 # passthrough (cast-free)
        # One pooling matmul for ALL bins.
        pooledT = jnp.dot(x, mpoolT_ref[...],
                          preferred_element_type=jnp.float32)   # (C, B2P)
        # One 1x1-conv matmul for ALL bins, BN shift + ReLU, block-diagonal mask.
        y = jnp.dot(w_ref[...], pooledT.astype(jnp.bfloat16),
                    preferred_element_type=jnp.float32)         # (nR, B2P)
        y = jnp.maximum(y + shift_ref[...], 0.0) * mask_ref[...]
        # One bilinear-upsample matmul for ALL bins.
        up = jnp.dot(y.astype(jnp.bfloat16), mupT_ref[...],
                     preferred_element_type=jnp.float32)        # (nR, HWp)
        o_ref[0, C:, :] = up.astype(o_ref.dtype)
    return kernel


def _make_pool_conv_kernel():
    """Tiled path, phase A: accumulate pooling over HW tiles, finalize conv+BN+ReLU+mask."""
    def kernel(x_ref, mpoolT_ref, w_ref, shift_ref, mask_ref, y_ref, acc_ref):
        t = pl.program_id(1)

        @pl.when(t == 0)
        def _():
            acc_ref[...] = jnp.zeros_like(acc_ref)

        acc_ref[...] += jnp.dot(x_ref[0], mpoolT_ref[...],
                                preferred_element_type=jnp.float32)   # (C, B2P)

        @pl.when(t == pl.num_programs(1) - 1)
        def _():
            y = jnp.dot(w_ref[...], acc_ref[...].astype(jnp.bfloat16),
                        preferred_element_type=jnp.float32)           # (nR, B2P)
            y = jnp.maximum(y + shift_ref[...], 0.0) * mask_ref[...]
            y_ref[0] = y.astype(y_ref.dtype)
    return kernel


def _make_upsample_kernel(C):
    """Tiled path, phase B: passthrough + upsample matmul per lane-aligned HW tile."""
    def kernel(x_ref, y_ref, mupT_ref, o_ref):
        o_ref[0, :C, :] = x_ref[0].astype(o_ref.dtype)
        up = jnp.dot(y_ref[0], mupT_ref[...],
                     preferred_element_type=jnp.float32)        # (nR, hw_tile)
        o_ref[0, C:, :] = up.astype(o_ref.dtype)
    return kernel


# ----------------------------------- forward wrapper -----------------------------------

def ppm_forward(x, w_scaled, shift, mask, mpoolT, mupT, bins, reduction_dim,
                *, hw_tile=None, out_dtype=jnp.bfloat16):
    """x: (N, C, H, W) NCHW f32.  Returns concat([x, branches], channel) in out_dtype.

    hw_tile=None  -> single fused call (x read from HBM once per batch element).
    hw_tile=int   -> two-phase HW-tiled path for large C*HW (e.g. 512..1024 at
                     production PSPNet sizes; required on v7x's 64 MiB VMEM).
    """
    N, C, H, W = x.shape
    HW = H * W
    HWp, B2P = mpoolT.shape
    R = reduction_dim
    nR = len(bins) * R
    C_out = C + nR
    vmem_limit = _vmem_limit_bytes()

    x_flat = x.reshape(N, C, HW).astype(jnp.bfloat16)       # NCHW-native, free reshape
    if HWp != HW:                                            # lane-pad HW to 128
        x_flat = jnp.pad(x_flat, ((0, 0), (0, 0), (0, HWp - HW)))

    if hw_tile is None:
        out = pl.pallas_call(
            _make_fused_kernel(C),
            out_shape=jax.ShapeDtypeStruct((N, C_out, HWp), out_dtype),
            grid_spec=pltpu.PrefetchScalarGridSpec(
                num_scalar_prefetch=0,
                grid=(N,),
                in_specs=[
                    pl.BlockSpec((1, C, HWp), lambda n: (n, 0, 0)),
                    pl.BlockSpec((HWp, B2P), lambda n: (0, 0),
                                 pipeline_mode=pl.Buffered(1)),     # grid-invariant
                    pl.BlockSpec((nR, C), lambda n: (0, 0),
                                 pipeline_mode=pl.Buffered(1)),
                    pl.BlockSpec((nR, 1), lambda n: (0, 0),
                                 pipeline_mode=pl.Buffered(1)),
                    pl.BlockSpec((nR, B2P), lambda n: (0, 0),
                                 pipeline_mode=pl.Buffered(1)),
                    pl.BlockSpec((B2P, HWp), lambda n: (0, 0),
                                 pipeline_mode=pl.Buffered(1)),
                ],
                out_specs=pl.BlockSpec((1, C_out, HWp), lambda n: (n, 0, 0)),
            ),
            compiler_params=pltpu.CompilerParams(
                dimension_semantics=("parallel",),
                vmem_limit_bytes=vmem_limit,
            ),
        )(x_flat, mpoolT, w_scaled, shift, mask, mupT)
    else:
        assert hw_tile % 128 == 0 and HWp % hw_tile == 0, (hw_tile, HWp)
        T = HWp // hw_tile

        # Phase A: pool + conv + BN + ReLU + mask, accumulating over HW tiles.
        y_all = pl.pallas_call(
            _make_pool_conv_kernel(),
            out_shape=jax.ShapeDtypeStruct((N, nR, B2P), jnp.bfloat16),
            grid_spec=pltpu.PrefetchScalarGridSpec(
                num_scalar_prefetch=0,
                grid=(N, T),
                in_specs=[
                    pl.BlockSpec((1, C, hw_tile), lambda n, t: (n, 0, t)),
                    pl.BlockSpec((hw_tile, B2P), lambda n, t: (t, 0)),
                    pl.BlockSpec((nR, C), lambda n, t: (0, 0),
                                 pipeline_mode=pl.Buffered(1)),
                    pl.BlockSpec((nR, 1), lambda n, t: (0, 0),
                                 pipeline_mode=pl.Buffered(1)),
                    pl.BlockSpec((nR, B2P), lambda n, t: (0, 0),
                                 pipeline_mode=pl.Buffered(1)),
                ],
                out_specs=pl.BlockSpec((1, nR, B2P), lambda n, t: (n, 0, 0)),
                scratch_shapes=[pltpu.VMEM((C, B2P), jnp.float32)],
            ),
            compiler_params=pltpu.CompilerParams(
                dimension_semantics=("parallel", "arbitrary"),
                vmem_limit_bytes=vmem_limit,
            ),
        )(x_flat, mpoolT, w_scaled, shift, mask)

        # Phase B: passthrough + upsample, gridded over lane-aligned HW tiles.
        out = pl.pallas_call(
            _make_upsample_kernel(C),
            out_shape=jax.ShapeDtypeStruct((N, C_out, HWp), out_dtype),
            grid_spec=pltpu.PrefetchScalarGridSpec(
                num_scalar_prefetch=0,
                grid=(N, T),
                in_specs=[
                    pl.BlockSpec((1, C, hw_tile), lambda n, t: (n, 0, t)),
                    pl.BlockSpec((1, nR, B2P), lambda n, t: (n, 0, 0)),
                    pl.BlockSpec((B2P, hw_tile), lambda n, t: (0, t)),
                ],
                out_specs=pl.BlockSpec((1, C_out, hw_tile), lambda n, t: (n, 0, t)),
            ),
            compiler_params=pltpu.CompilerParams(
                dimension_semantics=("parallel", "parallel"),
                vmem_limit_bytes=vmem_limit,
            ),
        )(x_flat, y_all, mupT)

    if HWp != HW:
        out = out[:, :, :HW]
    return out.reshape(N, C_out, H, W)


# ----------------------------------- reference (numpy) --------------------------------

def ppm_reference_numpy(x, params, bins):
    x = np.asarray(x, dtype=np.float64)
    N, C, H, W = x.shape
    outs = [x]
    for bin_size, p in zip(bins, params):
        ph = adaptive_pool_matrix(bin_size, H)
        pw = adaptive_pool_matrix(bin_size, W)
        ah = bilinear_upsample_matrix(H, bin_size)
        aw = bilinear_upsample_matrix(W, bin_size)
        w_rc = np.asarray(p["w"], dtype=np.float64)                  # (R, C)
        scale = np.asarray(p["scale"], dtype=np.float64)
        shift = np.asarray(p["shift"], dtype=np.float64)
        pooled = np.einsum("ih,nchw,jw->ncij", ph, x, pw)
        y = np.einsum("rc,ncij->nrij", w_rc, pooled)
        y = y * scale[None, :, None, None] + shift[None, :, None, None]
        y = np.maximum(y, 0.0)
        up = np.einsum("hi,nrij,wj->nrhw", ah, y, aw)
        outs.append(up)
    return np.concatenate(outs, axis=1)


# ----------------------------------------- main ----------------------------------------

if __name__ == "__main__":
    N, C, H, W = 2, 16, 16, 16       # in_dim = 16
    R = 4                            # reduction_dim = in_dim // len(bins)
    bins = (1, 2, 3, 6)
    eps = 1e-5

    key = jax.random.PRNGKey(0)
    xkey, pkey = jax.random.split(key)
    x = jax.random.normal(xkey, (N, C, H, W), dtype=jnp.float32)

    # Deterministic parameter init for each pyramid branch:
    #   Conv2d(C, R, 1, bias=False) weight (R, C, 1, 1) -> stored squeezed as (R, C).
    #   BatchNorm(R) gamma/beta/running_mean/running_var folded to scale/shift.
    params = []
    for i, _ in enumerate(bins):
        kw, kg, kb, km, kv = jax.random.split(jax.random.fold_in(pkey, i), 5)
        w = jax.random.normal(kw, (R, C), dtype=jnp.float32) / np.sqrt(C)
        gamma = 1.0 + 0.1 * jax.random.normal(kg, (R,), dtype=jnp.float32)
        beta = 0.1 * jax.random.normal(kb, (R,), dtype=jnp.float32)
        running_mean = 0.1 * jax.random.normal(km, (R,), dtype=jnp.float32)
        running_var = 1.0 + 0.1 * jax.random.uniform(kv, (R,), dtype=jnp.float32)
        scale = gamma / jnp.sqrt(running_var + eps)
        shift = beta - running_mean * scale
        params.append({"w": w, "scale": scale, "shift": shift})

    # Host-side constants, built once per (bins, H, W) configuration.
    mpoolT, mupT = build_ppm_matrices(bins, H, W)
    mask = build_block_diag_mask(bins, R)
    w_scaled, shift_stacked = fold_params(params)

    # Path 1: single fused call (x read from HBM once).
    out_fused = ppm_forward(x, w_scaled, shift_stacked, mask, mpoolT, mupT, bins, R)
    # Path 2: HW-tiled two-phase path (production / v7x path), exercised at toy size.
    out_tiled = ppm_forward(x, w_scaled, shift_stacked, mask, mpoolT, mupT, bins, R,
                            hw_tile=128)
    out_fused, out_tiled = jax.block_until_ready((out_fused, out_tiled))

    C_out = C + R * len(bins)
    assert out_fused.shape == (N, C_out, H, W), out_fused.shape
    assert out_tiled.shape == (N, C_out, H, W), out_tiled.shape

    # Tolerance widened vs an f32 implementation because inputs/weights/outputs are
    # bf16 (fp32 MXU accumulation keeps the error at ~1e-2 level).
    ref = ppm_reference_numpy(np.asarray(x), params, bins)
    np.testing.assert_allclose(np.asarray(out_fused.astype(jnp.float32)), ref,
                               rtol=5e-2, atol=5e-2)
    np.testing.assert_allclose(np.asarray(out_tiled.astype(jnp.float32)), ref,
                               rtol=5e-2, atol=5e-2)

    print("KERNEL_OK")
</pallas_src>

<mosaic_0001>
module attributes {stable_mosaic.version = 11 : i64} {
  func.func @kernel(%arg0: i32, %arg1: memref<1x16x256xbf16, #tpu.memory_space<vmem>>, %arg2: memref<256x128xbf16, #tpu.memory_space<vmem>>, %arg3: memref<16x16xbf16, #tpu.memory_space<vmem>>, %arg4: memref<16x1xf32, #tpu.memory_space<vmem>>, %arg5: memref<16x128xf32, #tpu.memory_space<vmem>>, %arg6: memref<128x256xbf16, #tpu.memory_space<vmem>>, %arg7: memref<1x32x256xbf16, #tpu.memory_space<vmem>>) attributes {dimension_semantics = [#tpu.dimension_semantics<parallel>], iteration_bounds = array<i64: 2>, scalar_prefetch = 0 : i64, scratch_operands = 0 : i64, tpu.core_type = #tpu.core_type<tc>, window_params = [{transform_indices = @transform_0, window_bounds = array<i64: 1, 16, 256>}, {pipeline_mode = #tpu.pipeline_mode<synchronous>, transform_indices = @transform_1, window_bounds = array<i64: 256, 128>}, {pipeline_mode = #tpu.pipeline_mode<synchronous>, transform_indices = @transform_2, window_bounds = array<i64: 16, 16>}, {pipeline_mode = #tpu.pipeline_mode<synchronous>, transform_indices = @transform_3, window_bounds = array<i64: 16, 1>}, {pipeline_mode = #tpu.pipeline_mode<synchronous>, transform_indices = @transform_4, window_bounds = array<i64: 16, 128>}, {pipeline_mode = #tpu.pipeline_mode<synchronous>, transform_indices = @transform_5, window_bounds = array<i64: 128, 256>}, {transform_indices = @transform_6, window_bounds = array<i64: 1, 32, 256>}]} {
    %c0 = arith.constant 0 : index
    %c0_0 = arith.constant 0 : index
    %c0_1 = arith.constant 0 : index
    %0 = vector.load %arg1[%c0, %c0_0, %c0_1] : memref<1x16x256xbf16, #tpu.memory_space<vmem>>, vector<1x16x256xbf16>
    %1 = vector.shape_cast %0 : vector<1x16x256xbf16> to vector<16x256xbf16>
    %c0_2 = arith.constant 0 : index
    %c0_3 = arith.constant 0 : index
    %c0_4 = arith.constant 0 : index
    %2 = vector.load %arg7[%c0_2, %c0_3, %c0_4] : memref<1x32x256xbf16, #tpu.memory_space<vmem>>, vector<1x16x256xbf16>
    %3 = vector.shape_cast %2 : vector<1x16x256xbf16> to vector<16x256xbf16>
    %4 = vector.shape_cast %1 : vector<16x256xbf16> to vector<1x16x256xbf16>
    tpu.vector_store %arg7[%c0_2, %c0_3, %c0_4], %4 {strides = array<i32>} : memref<1x32x256xbf16, #tpu.memory_space<vmem>>, vector<1x16x256xbf16>,
    %c0_5 = arith.constant 0 : index
    %c0_6 = arith.constant 0 : index
    %5 = vector.load %arg2[%c0_5, %c0_6] : memref<256x128xbf16, #tpu.memory_space<vmem>>, vector<256x128xbf16>
    %cst = arith.constant dense<0.000000e+00> : vector<16x128xf32>
    %6 = tpu.matmul %1, %5, %cst {dimension_numbers = #tpu.dot_dimension_numbers<[1], [0], [0], [1], [0, 0, 1, 1], [], []>} : vector<16x256xbf16>, vector<256x128xbf16>, vector<16x128xf32> -> vector<16x128xf32>
    %c0_7 = arith.constant 0 : index
    %c0_8 = arith.constant 0 : index
    %7 = vector.load %arg3[%c0_7, %c0_8] : memref<16x16xbf16, #tpu.memory_space<vmem>>, vector<16x16xbf16>
    %8 = arith.truncf %6 : vector<16x128xf32> to vector<16x128xbf16>
    %cst_9 = arith.constant dense<0.000000e+00> : vector<16x128xf32>
    %9 = tpu.matmul %7, %8, %cst_9 {dimension_numbers = #tpu.dot_dimension_numbers<[1], [0], [0], [1], [0, 0, 1, 1], [], []>} : vector<16x16xbf16>, vector<16x128xbf16>, vector<16x128xf32> -> vector<16x128xf32>
    %c0_10 = arith.constant 0 : index
    %c0_11 = arith.constant 0 : index
    %10 = vector.load %arg4[%c0_10, %c0_11] : memref<16x1xf32, #tpu.memory_space<vmem>>, vector<16x1xf32>
    %11 = vector.broadcast %10 : vector<16x1xf32> to vector<16x128xf32>
    %12 = arith.addf %9, %11 : vector<16x128xf32>
    %cst_12 = arith.constant 0.000000e+00 : f32
    %13 = vector.broadcast %cst_12 : f32 to vector<16x128xf32>
    %14 = arith.maximumf %12, %13 : vector<16x128xf32>
    %c0_13 = arith.constant 0 : index
    %c0_14 = arith.constant 0 : index
    %15 = vector.load %arg5[%c0_13, %c0_14] : memref<16x128xf32, #tpu.memory_space<vmem>>, vector<16x128xf32>
    %16 = arith.mulf %14, %15 : vector<16x128xf32>
    %17 = arith.truncf %16 : vector<16x128xf32> to vector<16x128xbf16>
    %c0_15 = arith.constant 0 : index
    %c0_16 = arith.constant 0 : index
    %18 = vector.load %arg6[%c0_15, %c0_16] : memref<128x256xbf16, #tpu.memory_space<vmem>>, vector<128x256xbf16>
    %cst_17 = arith.constant dense<0.000000e+00> : vector<16x256xf32>
    %19 = tpu.matmul %17, %18, %cst_17 {dimension_numbers = #tpu.dot_dimension_numbers<[1], [0], [0], [1], [0, 0, 1, 1], [], []>} : vector<16x128xbf16>, vector<128x256xbf16>, vector<16x256xf32> -> vector<16x256xf32>
    %20 = arith.truncf %19 : vector<16x256xf32> to vector<16x256xbf16>
    %c0_18 = arith.constant 0 : index
    %c16 = arith.constant 16 : index
    %c0_19 = arith.constant 0 : index
    %21 = vector.load %arg7[%c0_18, %c16, %c0_19] : memref<1x32x256xbf16, #tpu.memory_space<vmem>>, vector<1x16x256xbf16>
    %22 = vector.shape_cast %21 : vector<1x16x256xbf16> to vector<16x256xbf16>
    %23 = vector.shape_cast %20 : vector<16x256xbf16> to vector<1x16x256xbf16>
    tpu.vector_store %arg7[%c0_18, %c16, %c0_19], %23 {strides = array<i32>} : memref<1x32x256xbf16, #tpu.memory_space<vmem>>, vector<1x16x256xbf16>,
    return
  }
  func.func @transform_0(%arg0: i32) -> (i32, i32, i32) {
    %c0_i32 = arith.constant 0 : i32
    %c0_i32_0 = arith.constant 0 : i32
    %c0_i32_1 = arith.constant 0 : i32
    return %arg0, %c0_i32, %c0_i32_0 : i32, i32, i32
  }
  func.func @transform_1(%arg0: i32) -> (i32, i32) {
    %c0_i32 = arith.constant 0 : i32
    %c0_i32_0 = arith.constant 0 : i32
    %c0_i32_1 = arith.constant 0 : i32
    return %c0_i32, %c0_i32_0 : i32, i32
  }
  func.func @transform_2(%arg0: i32) -> (i32, i32) {
    %c0_i32 = arith.constant 0 : i32
    %c0_i32_0 = arith.constant 0 : i32
    %c0_i32_1 = arith.constant 0 : i32
    return %c0_i32, %c0_i32_0 : i32, i32
  }
  func.func @transform_3(%arg0: i32) -> (i32, i32) {
    %c0_i32 = arith.constant 0 : i32
    %c0_i32_0 = arith.constant 0 : i32
    %c0_i32_1 = arith.constant 0 : i32
    return %c0_i32, %c0_i32_0 : i32, i32
  }
  func.func @transform_4(%arg0: i32) -> (i32, i32) {
    %c0_i32 = arith.constant 0 : i32
    %c0_i32_0 = arith.constant 0 : i32
    %c0_i32_1 = arith.constant 0 : i32
    return %c0_i32, %c0_i32_0 : i32, i32
  }
  func.func @transform_5(%arg0: i32) -> (i32, i32) {
    %c0_i32 = arith.constant 0 : i32
    %c0_i32_0 = arith.constant 0 : i32
    %c0_i32_1 = arith.constant 0 : i32
    return %c0_i32, %c0_i32_0 : i32, i32
  }
  func.func @transform_6(%arg0: i32) -> (i32, i32, i32) {
    %c0_i32 = arith.constant 0 : i32
    %c0_i32_0 = arith.constant 0 : i32
    %c0_i32_1 = arith.constant 0 : i32
    return %arg0, %c0_i32, %c0_i32_0 : i32, i32, i32
  }
}

</mosaic_0001>

<llo_original>
// kernel: tpu_custom_call.1
$region0: #{tpu_custom_call.1}
  #allocation0 [shape = 'u32[]', space=smem, size = 0x4, offset = 0x4, fixed_abs, tag = 'smem constant byte address 0x4 - core index']
  #allocation1 [shape = 'u32[144,128]{1,0:T(1,128)}', space=vmem, size = 0x12000, scoped, tag = 'internal scratch']
  %s0 = inlined_call_operand.hbm [shape: bf16[2,16,256], index: 0, kind: input, shape index: {}]
  %s1 = inlined_call_operand.hbm [shape: bf16[256,128], index: 1, kind: input, shape index: {}]
  %s2 = inlined_call_operand.hbm [shape: bf16[16,16], index: 2, kind: input, shape index: {}]
  %s3 = inlined_call_operand.hbm [shape: f32[16,1], index: 3, kind: input, shape index: {}]
  %s4 = inlined_call_operand.hbm [shape: f32[16,128], index: 4, kind: input, shape index: {}]
  %s5 = inlined_call_operand.hbm [shape: bf16[128,256], index: 5, kind: input, shape index: {}]
  %s6 = inlined_call_operand.hbm [shape: bf16[2,32,256], index: 6, kind: output, shape index: {}]
  %s7 = sld [smem:[#allocation0]]
  $region81: #{tpu_custom_call.1} parent=0
    _
  %s9 = ssub.s32 1, %s7
  %s10 = scalar_select 0, %s9, %s7
  $region1: #{tpu_custom_call.1} parent=0
    #allocation2 [shape = 'u8[16384]{0}', space=vmem, size = 0x4000, scoped, tag = 'input window, operand 0']
    #allocation3 [shape = 's32[2]{0}', space=sflag, size = 0x8, scoped, tag = 'scoped memory for tpu_custom_call.1']
    #allocation4 [shape = 's32[2]{0}', space=sflag, size = 0x8, scoped, tag = 'scoped memory for tpu_custom_call.1']
    #allocation5 [shape = 'u8[65536]{0}', space=vmem, size = 0x10000, scoped, tag = 'input window, operand 1, single buffered']
    #allocation6 [shape = 's32[1]{0}', space=sflag, size = 0x4, scoped, tag = 'scoped memory for tpu_custom_call.1']
    #allocation7 [shape = 'u8[4096]{0}', space=vmem, size = 0x1000, scoped, tag = 'input window, operand 2, single buffered']
    #allocation8 [shape = 'u8[8192]{0}', space=vmem, size = 0x2000, scoped, tag = 'input window, operand 3, single buffered']
    #allocation9 [shape = 's32[1]{0}', space=sflag, size = 0x4, scoped, tag = 'scoped memory for tpu_custom_call.1']
    #allocation10 [shape = 'u8[8192]{0}', space=vmem, size = 0x2000, scoped, tag = 'input window, operand 4, single buffered']
    #allocation11 [shape = 'u8[65536]{0}', space=vmem, size = 0x10000, scoped, tag = 'input window, operand 5, single buffered']
    #allocation12 [shape = 's32[1]{0}', space=sflag, size = 0x4, scoped, tag = 'scoped memory for tpu_custom_call.1']
    #allocation13 [shape = 'u8[32768]{0}', space=vmem, size = 0x8000, scoped, tag = 'output window, operand 0']
    %11 = vsyncpa [#allocation3], 0
    %s12 = scalar_lea.sflag [#allocation3], 1
    %13 = vsyncpa %s12, 0
    %14 = vsyncpa [#allocation6], 0
    %15 = vsyncpa [#allocation9], 0
    %16 = vsyncpa [#allocation12], 0
    %17 = vsyncpa [#allocation4], 0
    %s18 = scalar_lea.sflag [#allocation4], 1
    %19 = vsyncpa %s18, 0
    loop: start=0, step=1, limit=4
    $region2: #{tpu_custom_call.1} parent=1 // loop_pre_header
      _
    $region3: #{tpu_custom_call.1} parent=1 // loop_header
      %s21 = sphi 0, %s25
      %p22 = scmp.ge.s32.totalorder %s21, 4
      %s31 = sphi 0, %s33
      %s34 = sphi 0, %s31
      %s35 = sphi 0, %s34
      %s51 = sphi 0, %s35
      %s55 = sphi 0, %s55
      %s57 = sphi 0, %s55
      %s58 = sphi 0, %s57
      %s72 = sphi 0, %s58
      %s76 = sphi 0, %s76
      %s78 = sphi 0, %s76
      %s79 = sphi 0, %s78
      %s93 = sphi 0, %s79
      %s97 = sphi 0, %s97
      %s99 = sphi 0, %s97
      %s100 = sphi 0, %s99
      %s114 = sphi 0, %s100
      %s118 = sphi 0, %s118
      %s120 = sphi 0, %s118
      %s121 = sphi 0, %s120
      %s135 = sphi 0, %s121
      %s139 = sphi 0, %s139
      %s141 = sphi 0, %s139
      %s142 = sphi 0, %s141
      %s156 = sphi 0, %s142
      %s162 = sphi 0, %s164
      %s165 = sphi 0, %s162
      %s166 = sphi 0, %s165
      %s182 = sphi 0, %s166
    $region4: #{tpu_custom_call.1} parent=1 // loop_header_branch
      %24 = sbr.rel (%p22) target = $region8
    $region5: #{tpu_custom_call.1} parent=1 // loop_body
      %s26 = ssub.s32 %s21, 1
      %s27 = ssub.s32 %s21, 2
      %s28 = sadd.s32 %s21, 1
      %s29 = ssub.s32 %s21, %s28
      %p30 = scmp.eq.s32.totalorder %s29, 0
      %s32 = sadd.s32 %s31, 1
      %s33 = scalar_select %p30, %s31, %s32
      %p36 = pneg %p30
      %p37 = scmp.eq.s32.totalorder %s21, 1
      %p38 = por %p36, %p37
      %p39 = scmp.ne.s32.totalorder %s31, %s34
      %p40 = scmp.eq.s32.totalorder %s21, 0
      %p41 = por %p39, %p40
      %p42 = scmp.ne.s32.totalorder %s31, %s34
      %p43 = scmp.eq.s32.totalorder %s26, 1
      %p44 = por %p42, %p43
      %p45 = scmp.ne.s32.totalorder %s34, %s35
      %p46 = scmp.eq.s32.totalorder %s26, 0
      %p47 = por %p45, %p46
      %p48 = scmp.ne.s32.totalorder %s34, %s35
      %p49 = scmp.eq.s32.totalorder %s27, 1
      %p50 = por %p48, %p49
      %p52 = scmp.ne.s32.totalorder %s35, %s51
      %p53 = scmp.eq.s32.totalorder %s27, 0
      %p54 = por %p52, %p53
      %s56 = sadd.s32 %s55, 1
      %p59 = scmp.eq.s32.totalorder %s21, 1
      %p60 = scmp.ne.s32.totalorder %s55, %s57
      %p61 = scmp.eq.s32.totalorder %s21, 0
      %p62 = por %p60, %p61
      %p63 = scmp.ne.s32.totalorder %s55, %s57
      %p64 = scmp.eq.s32.totalorder %s26, 1
      %p65 = por %p63, %p64
      %p66 = scmp.ne.s32.totalorder %s57, %s58
      %p67 = scmp.eq.s32.totalorder %s26, 0
      %p68 = por %p66, %p67
      %p69 = scmp.ne.s32.totalorder %s57, %s58
      %p70 = scmp.eq.s32.totalorder %s27, 1
      %p71 = por %p69, %p70
      %p73 = scmp.ne.s32.totalorder %s58, %s72
      %p74 = scmp.eq.s32.totalorder %s27, 0
      %p75 = por %p73, %p74
      %s77 = sadd.s32 %s76, 1
      %p80 = scmp.eq.s32.totalorder %s21, 1
      %p81 = scmp.ne.s32.totalorder %s76, %s78
      %p82 = scmp.eq.s32.totalorder %s21, 0
      %p83 = por %p81, %p82
      %p84 = scmp.ne.s32.totalorder %s76, %s78
      %p85 = scmp.eq.s32.totalorder %s26, 1
      %p86 = por %p84, %p85
      %p87 = scmp.ne.s32.totalorder %s78, %s79
      %p88 = scmp.eq.s32.totalorder %s26, 0
      %p89 = por %p87, %p88
      %p90 = scmp.ne.s32.totalorder %s78, %s79
      %p91 = scmp.eq.s32.totalorder %s27, 1
      %p92 = por %p90, %p91
      %p94 = scmp.ne.s32.totalorder %s79, %s93
      %p95 = scmp.eq.s32.totalorder %s27, 0
      %p96 = por %p94, %p95
      %s98 = sadd.s32 %s97, 1
      %p101 = scmp.eq.s32.totalorder %s21, 1
      %p102 = scmp.ne.s32.totalorder %s97, %s99
      %p103 = scmp.eq.s32.totalorder %s21, 0
      %p104 = por %p102, %p103
      %p105 = scmp.ne.s32.totalorder %s97, %s99
      %p106 = scmp.eq.s32.totalorder %s26, 1
      %p107 = por %p105, %p106
      %p108 = scmp.ne.s32.totalorder %s99, %s100
      %p109 = scmp.eq.s32.totalorder %s26, 0
      %p110 = por %p108, %p109
      %p111 = scmp.ne.s32.totalorder %s99, %s100
      %p112 = scmp.eq.s32.totalorder %s27, 1
      %p113 = por %p111, %p112
      %p115 = scmp.ne.s32.totalorder %s100, %s114
      %p116 = scmp.eq.s32.totalorder %s27, 0
      %p117 = por %p115, %p116
      %s119 = sadd.s32 %s118, 1
      %p122 = scmp.eq.s32.totalorder %s21, 1
      %p123 = scmp.ne.s32.totalorder %s118, %s120
      %p124 = scmp.eq.s32.totalorder %s21, 0
      %p125 = por %p123, %p124
      %p126 = scmp.ne.s32.totalorder %s118, %s120
      %p127 = scmp.eq.s32.totalorder %s26, 1
      %p128 = por %p126, %p127
      %p129 = scmp.ne.s32.totalorder %s120, %s121
      %p130 = scmp.eq.s32.totalorder %s26, 0
      %p131 = por %p129, %p130
      %p132 = scmp.ne.s32.totalorder %s120, %s121
      %p133 = scmp.eq.s32.totalorder %s27, 1
      %p134 = por %p132, %p133
      %p136 = scmp.ne.s32.totalorder %s121, %s135
      %p137 = scmp.eq.s32.totalorder %s27, 0
      %p138 = por %p136, %p137
      %s140 = sadd.s32 %s139, 1
      %p143 = scmp.eq.s32.totalorder %s21, 1
      %p144 = scmp.ne.s32.totalorder %s139, %s141
      %p145 = scmp.eq.s32.totalorder %s21, 0
      %p146 = por %p144, %p145
      %p147 = scmp.ne.s32.totalorder %s139, %s141
      %p148 = scmp.eq.s32.totalorder %s26, 1
      %p149 = por %p147, %p148
      %p150 = scmp.ne.s32.totalorder %s141, %s142
      %p151 = scmp.eq.s32.totalorder %s26, 0
      %p152 = por %p150, %p151
      %p153 = scmp.ne.s32.totalorder %s141, %s142
      %p154 = scmp.eq.s32.totalorder %s27, 1
      %p155 = por %p153, %p154
      %p157 = scmp.ne.s32.totalorder %s142, %s156
      %p158 = scmp.eq.s32.totalorder %s27, 0
      %p159 = por %p157, %p158
      %s160 = ssub.s32 %s21, %s28
      %p161 = scmp.eq.s32.totalorder %s160, 0
      %s163 = sadd.s32 %s162, 1
      %s164 = scalar_select %p161, %s162, %s163
      %p167 = pneg %p161
      %p168 = scmp.eq.s32.totalorder %s21, 1
      %p169 = por %p167, %p168
      %p170 = scmp.ne.s32.totalorder %s162, %s165
      %p171 = scmp.eq.s32.totalorder %s21, 0
      %p172 = por %p170, %p171
      %p173 = scmp.ne.s32.totalorder %s162, %s165
      %p174 = scmp.eq.s32.totalorder %s26, 1
      %p175 = por %p173, %p174
      %p176 = scmp.ne.s32.totalorder %s165, %s166
      %p177 = scmp.eq.s32.totalorder %s26, 0
      %p178 = por %p176, %p177
      %p179 = scmp.ne.s32.totalorder %s165, %s166
      %p180 = scmp.eq.s32.totalorder %s27, 1
      %p181 = por %p179, %p180
      %p183 = scmp.ne.s32.totalorder %s166, %s182
      %p184 = scmp.eq.s32.totalorder %s27, 0
      %p185 = por %p183, %p184
      %p186 = scmp.le.s32.totalorder 1, %s21
      %p187 = scmp.lt.s32.totalorder %s21, 3
      %p188 = pnand %p186, %p187
      %p189 = pneg %p188
      // Predicated region
      $region9: #{tpu_custom_call.1} parent=5 // pred_check
        _
      $region10: #{tpu_custom_call.1} parent=5 // pred_check_branch
        %191 = sbr.rel (%p188) target = $region12
      $region11: #{tpu_custom_call.1} parent=5 // pred_region
        %s192 = ssub.s32 %s21, 1
        // Predicated region
        $region13: #{tpu_custom_call.1} parent=11 // pred_check
          %p193 = pneg %p68
        $region14: #{tpu_custom_call.1} parent=11 // pred_check_branch
          %195 = sbr.rel (%p193) target = $region16
        $region15: #{tpu_custom_call.1} parent=11 // pred_region
          %s197 = ssub.s32 2048, 2048
          %198 = vsyncadd [#allocation6], %s197
          %s199 = sshll.u32 [#allocation5], 4
          %s200 = int_to_ptr.vmem [resolvable:$true] %s199
          %205 = dma.hbm_to_vmem [thread:$0]  %s1, 2048, %s200, [#allocation6], 64, 64, 4
        $region16: #{tpu_custom_call.1} parent=11 // pred_fallthru
          _
        // Predicated region
        $region17: #{tpu_custom_call.1} parent=11 // pred_check
          %p206 = pneg %p89
        $region18: #{tpu_custom_call.1} parent=11 // pred_check_branch
          %208 = sbr.rel (%p206) target = $region20
        $region19: #{tpu_custom_call.1} parent=11 // pred_region
          %s210 = ssub.s32 128, 128
          %211 = vsyncadd [#allocation6], %s210
          %s212 = sshll.u32 [#allocation7], 4
          %s213 = int_to_ptr.vmem [resolvable:$true] %s212
          %218 = dma.hbm_to_vmem [thread:$0]  %s2, 128, %s213, [#allocation6], 64, 64, 4
        $region20: #{tpu_custom_call.1} parent=11 // pred_fallthru
          _
        // Predicated region
        $region21: #{tpu_custom_call.1} parent=11 // pred_check
          %p219 = pneg %p110
        $region22: #{tpu_custom_call.1} parent=11 // pred_check_branch
          %221 = sbr.rel (%p219) target = $region24
        $region23: #{tpu_custom_call.1} parent=11 // pred_region
          %s223 = ssub.s32 256, 256
          %224 = vsyncadd [#allocation9], %s223
          %s225 = sshll.u32 [#allocation8], 4
          %s226 = int_to_ptr.vmem [resolvable:$true] %s225
          %231 = dma.hbm_to_vmem [thread:$0]  %s3, 256, %s226, [#allocation9], 128, 128, 8
        $region24: #{tpu_custom_call.1} parent=11 // pred_fallthru
          _
        // Predicated region
        $region25: #{tpu_custom_call.1} parent=11 // pred_check
          %p232 = pneg %p131
        $region26: #{tpu_custom_call.1} parent=11 // pred_check_branch
          %234 = sbr.rel (%p232) target = $region28
        $region27: #{tpu_custom_call.1} parent=11 // pred_region
          %s236 = ssub.s32 256, 256
          %237 = vsyncadd [#allocation9], %s236
          %s238 = sshll.u32 [#allocation10], 4
          %s239 = int_to_ptr.vmem [resolvable:$true] %s238
          %244 = dma.hbm_to_vmem [thread:$0]  %s4, 256, %s239, [#allocation9], 128, 128, 8
        $region28: #{tpu_custom_call.1} parent=11 // pred_fallthru
          _
        // Predicated region
        $region29: #{tpu_custom_call.1} parent=11 // pred_check
          %p245 = pneg %p152
        $region30: #{tpu_custom_call.1} parent=11 // pred_check_branch
          %247 = sbr.rel (%p245) target = $region32
        $region31: #{tpu_custom_call.1} parent=11 // pred_region
          %s249 = ssub.s32 2048, 2048
          %250 = vsyncadd [#allocation12], %s249
          %s251 = sshll.u32 [#allocation11], 4
          %s252 = int_to_ptr.vmem [resolvable:$true] %s251
          %257 = dma.hbm_to_vmem [thread:$0]  %s5, 2048, %s252, [#allocation12], 128, 128, 8
        $region32: #{tpu_custom_call.1} parent=11 // pred_fallthru
          _
      $region12: #{tpu_custom_call.1} parent=5 // pred_fallthru
        _
      %p258 = scmp.lt.s32.totalorder %s21, 2
      // Predicated region
      $region33: #{tpu_custom_call.1} parent=5 // pred_check
        %p259 = pneg %p258
      $region34: #{tpu_custom_call.1} parent=5 // pred_check_branch
        %261 = sbr.rel (%p259) target = $region36
      $region35: #{tpu_custom_call.1} parent=5 // pred_region
        // Predicated region
        $region37: #{tpu_custom_call.1} parent=35 // pred_check
          %p262 = pneg %p41
        $region38: #{tpu_custom_call.1} parent=35 // pred_check_branch
          %264 = sbr.rel (%p262) target = $region40
        $region39: #{tpu_custom_call.1} parent=35 // pred_region
          %s265 = sand.u32 %s31, 1
          %s266 = scalar_lea.sflag [#allocation3], %s265
          %s267 = sand.u32 %s31, 1
          %s268 = smul.addr %s267, 16
          %s269 = scalar_lea.vmem [#allocation2], %s268
          %s271 = ssub.s32 256, 256
          %272 = vsyncadd %s266, %s271
          %s273 = smul.addr %s21, 4
          %s274 = smul.addr %s273, 64
          %s275 = scalar_lea.hbm %s0, %s274
          %s276 = sshll.u32 %s269, 4
          %s277 = int_to_ptr.vmem [resolvable:$true] %s276
          %282 = dma.hbm_to_vmem [thread:$0]  %s275, 256, %s277, %s266, 128, 128, 8
        $region40: #{tpu_custom_call.1} parent=35 // pred_fallthru
          _
      $region36: #{tpu_custom_call.1} parent=5 // pred_fallthru
        _
      %p283 = scmp.le.s32.totalorder 1, %s21
      %p284 = scmp.lt.s32.totalorder %s21, 3
      %p285 = pnand %p283, %p284
      %p286 = pneg %p285
      // Predicated region
      $region41: #{tpu_custom_call.1} parent=5 // pred_check
        _
      $region42: #{tpu_custom_call.1} parent=5 // pred_check_branch
        %288 = sbr.rel (%p285) target = $region44
      $region43: #{tpu_custom_call.1} parent=5 // pred_region
        %s289 = ssub.s32 %s21, 1
        %s290 = sand.u32 %s34, 1
        %s291 = scalar_lea.sflag [#allocation3], %s290
        %s292 = sand.u32 %s34, 1
        %s293 = smul.addr %s292, 16
        %s294 = scalar_lea.vmem [#allocation2], %s293
        // Predicated region
        $region45: #{tpu_custom_call.1} parent=43 // pred_check
          %p295 = pneg %p47
        $region46: #{tpu_custom_call.1} parent=43 // pred_check_branch
          %297 = sbr.rel (%p295) target = $region48
        $region47: #{tpu_custom_call.1} parent=43 // pred_region
          %298 = dma.done %s291, 256
        $region48: #{tpu_custom_call.1} parent=43 // pred_fallthru
          _
        // Predicated region
        $region49: #{tpu_custom_call.1} parent=43 // pred_check
          %p299 = pneg %p68
        $region50: #{tpu_custom_call.1} parent=43 // pred_check_branch
          %301 = sbr.rel (%p299) target = $region52
        $region51: #{tpu_custom_call.1} parent=43 // pred_region
          %302 = dma.done [#allocation6], 2048
        $region52: #{tpu_custom_call.1} parent=43 // pred_fallthru
          _
        // Predicated region
        $region53: #{tpu_custom_call.1} parent=43 // pred_check
          %p303 = pneg %p89
        $region54: #{tpu_custom_call.1} parent=43 // pred_check_branch
          %305 = sbr.rel (%p303) target = $region56
        $region55: #{tpu_custom_call.1} parent=43 // pred_region
          %306 = dma.done [#allocation6], 128
        $region56: #{tpu_custom_call.1} parent=43 // pred_fallthru
          _
        // Predicated region
        $region57: #{tpu_custom_call.1} parent=43 // pred_check
          %p307 = pneg %p110
        $region58: #{tpu_custom_call.1} parent=43 // pred_check_branch
          %309 = sbr.rel (%p307) target = $region60
        $region59: #{tpu_custom_call.1} parent=43 // pred_region
          %310 = dma.done [#allocation9], 256
        $region60: #{tpu_custom_call.1} parent=43 // pred_fallthru
          _
        // Predicated region
        $region61: #{tpu_custom_call.1} parent=43 // pred_check
          %p311 = pneg %p131
        $region62: #{tpu_custom_call.1} parent=43 // pred_check_branch
          %313 = sbr.rel (%p311) target = $region64
        $region63: #{tpu_custom_call.1} parent=43 // pred_region
          %314 = dma.done [#allocation9], 256
        $region64: #{tpu_custom_call.1} parent=43 // pred_fallthru
          _
        // Predicated region
        $region65: #{tpu_custom_call.1} parent=43 // pred_check
          %p315 = pneg %p152
        $region66: #{tpu_custom_call.1} parent=43 // pred_check_branch
          %317 = sbr.rel (%p315) target = $region68
        $region67: #{tpu_custom_call.1} parent=43 // pred_region
          %318 = dma.done [#allocation12], 2048
        $region68: #{tpu_custom_call.1} parent=43 // pred_fallthru
          _
        %s319 = sand.u32 %s34, 1
        %s320 = scalar_lea.sflag [#allocation3], %s319
        %s321 = sand.u32 %s34, 1
        %s322 = smul.addr %s321, 16
        %s323 = scalar_lea.vmem [#allocation2], %s322
        %p324 = pneg %p47
        %p325 = pneg %p44
        %p326 = pneg %p68
        %p327 = pneg %p65
        %p328 = pneg %p89
        %p329 = pneg %p86
        %p330 = pneg %p110
        %p331 = pneg %p107
        %p332 = pneg %p131
        %p333 = pneg %p128
        %p334 = pneg %p152
        %p335 = pneg %p149
        %p336 = pneg %p178
        %p337 = pneg %p175
        %s338 = sand.u32 %s165, 1
        %s339 = scalar_lea.sflag [#allocation4], %s338
        %s340 = sand.u32 %s165, 1
        %s341 = smul.addr %s340, 32
        %s342 = scalar_lea.vmem [#allocation13], %s341
        %v344 = vld [vmem:[%s294] sm:$0xff]
        %v345 = vld [vmem:[%s294 + $0x8] sm:$0xff]
        %346 = vst [vmem:[%s342] sm:$0xff] %v344
        %347 = vst [vmem:[%s342 + $0x8] sm:$0xff] %v345
        %v348 = vld [vmem:[#allocation5] sm:$0xf]
        %v349 = vld [vmem:[#allocation5 + $0x4] sm:$0xf]
        %v350 = vld [vmem:[#allocation5 + $0x8] sm:$0xf]
        %v351 = vld [vmem:[#allocation5 + $0xc] sm:$0xf]
        %v352 = vld [vmem:[#allocation5 + $0x10] sm:$0xf]
        %v353 = vld [vmem:[#allocation5 + $0x14] sm:$0xf]
        %v354 = vld [vmem:[#allocation5 + $0x18] sm:$0xf]
        %v355 = vld [vmem:[#allocation5 + $0x1c] sm:$0xf]
        %v356 = vld [vmem:[#allocation5 + $0x20] sm:$0xf]
        %v357 = vld [vmem:[#allocation5 + $0x24] sm:$0xf]
        %v358 = vld [vmem:[#allocation5 + $0x28] sm:$0xf]
        %v359 = vld [vmem:[#allocation5 + $0x2c] sm:$0xf]
        %v360 = vld [vmem:[#allocation5 + $0x30] sm:$0xf]
        %v361 = vld [vmem:[#allocation5 + $0x34] sm:$0xf]
        %v362 = vld [vmem:[#allocation5 + $0x38] sm:$0xf]
        %v363 = vld [vmem:[#allocation5 + $0x3c] sm:$0xf]
        %v364 = vld [vmem:[#allocation5 + $0x40] sm:$0xf]
        %v365 = vld [vmem:[#allocation5 + $0x44] sm:$0xf]
        %v366 = vld [vmem:[#allocation5 + $0x48] sm:$0xf]
        %v367 = vld [vmem:[#allocation5 + $0x4c] sm:$0xf]
        %v368 = vld [vmem:[#allocation5 + $0x50] sm:$0xf]
        %v369 = vld [vmem:[#allocation5 + $0x54] sm:$0xf]
        %v370 = vld [vmem:[#allocation5 + $0x58] sm:$0xf]
        %v371 = vld [vmem:[#allocation5 + $0x5c] sm:$0xf]
        %v372 = vld [vmem:[#allocation5 + $0x60] sm:$0xf]
        %v373 = vld [vmem:[#allocation5 + $0x64] sm:$0xf]
        %v374 = vld [vmem:[#allocation5 + $0x68] sm:$0xf]
        %v375 = vld [vmem:[#allocation5 + $0x6c] sm:$0xf]
        %v376 = vld [vmem:[#allocation5 + $0x70] sm:$0xf]
        %v377 = vld [vmem:[#allocation5 + $0x74] sm:$0xf]
        %v378 = vld [vmem:[#allocation5 + $0x78] sm:$0xf]
        %v379 = vld [vmem:[#allocation5 + $0x7c] sm:$0xf]
        %v382 = vunpack.c.l.b16 %v344
        %v383 = vunpack.c.h.b16 %v344
        %v384 = vunpack.c.l.b16 %v345
        %v385 = vunpack.c.h.b16 %v345
        %v386 = vpack.c.b16 %v384, %v382
        %v387 = vpack.c.b16 %v385, %v383
        %v422 = vunpack.c.l.b16 %v348
        %v423 = vunpack.c.l.b16 %v349
        %v424 = vunpack.c.l.b16 %v350
        %v425 = vunpack.c.l.b16 %v351
        %v426 = vunpack.c.l.b16 %v352
        %v427 = vunpack.c.l.b16 %v353
        %v428 = vunpack.c.l.b16 %v354
        %v429 = vunpack.c.l.b16 %v355
        %v430 = vunpack.c.l.b16 %v356
        %v431 = vunpack.c.l.b16 %v357
        %v432 = vunpack.c.l.b16 %v358
        %v433 = vunpack.c.l.b16 %v359
        %v434 = vunpack.c.l.b16 %v360
        %v435 = vunpack.c.l.b16 %v361
        %v436 = vunpack.c.l.b16 %v362
        %v437 = vunpack.c.l.b16 %v363
        %v438 = vunpack.c.l.b16 %v364
        %v439 = vunpack.c.l.b16 %v365
        %v440 = vunpack.c.l.b16 %v366
        %v441 = vunpack.c.l.b16 %v367
        %v442 = vunpack.c.l.b16 %v368
        %v443 = vunpack.c.l.b16 %v369
        %v444 = vunpack.c.l.b16 %v370
        %v445 = vunpack.c.l.b16 %v371
        %v446 = vunpack.c.l.b16 %v372
        %v447 = vunpack.c.l.b16 %v373
        %v448 = vunpack.c.l.b16 %v374
        %v449 = vunpack.c.l.b16 %v375
        %v450 = vunpack.c.l.b16 %v376
        %v451 = vunpack.c.l.b16 %v377
        %v452 = vunpack.c.l.b16 %v378
        %v453 = vunpack.c.l.b16 %v379
        %v454 = vpack.c.b16 %v423, %v422
        %v455 = vpack.c.b16 %v425, %v424
        %v456 = vpack.c.b16 %v427, %v426
        %v457 = vpack.c.b16 %v429, %v428
        %v458 = vpack.c.b16 %v431, %v430
        %v459 = vpack.c.b16 %v433, %v432
        %v460 = vpack.c.b16 %v435, %v434
        %v461 = vpack.c.b16 %v437, %v436
        %v462 = vpack.c.b16 %v439, %v438
        %v463 = vpack.c.b16 %v441, %v440
        %v464 = vpack.c.b16 %v443, %v442
        %v465 = vpack.c.b16 %v445, %v444
        %v466 = vpack.c.b16 %v447, %v446
        %v467 = vpack.c.b16 %v449, %v448
        %v468 = vpack.c.b16 %v451, %v450
        %v469 = vpack.c.b16 %v453, %v452
        %486 = vmatprep.subr.bf16.mxu0 0
        %487 = vmatpush1.bf16.msra.mxu0 %v454
        %488 = vmatprep.subr.bf16.mxu0 0
        %489 = vmatpush1.bf16.msra.mxu0 %v455
        %490 = vmatprep.subr.bf16.mxu0 0
        %491 = vmatpush1.bf16.msra.mxu0 %v456
        %492 = vmatprep.subr.bf16.mxu0 0
        %493 = vmatpush1.bf16.msra.mxu0 %v457
        %494 = vmatprep.subr.bf16.mxu0 0
        %495 = vmatpush1.bf16.msra.mxu0 %v458
        %496 = vmatprep.subr.bf16.mxu0 0
        %497 = vmatpush1.bf16.msra.mxu0 %v459
        %498 = vmatprep.subr.bf16.mxu0 0
        %499 = vmatpush1.bf16.msra.mxu0 %v460
        %500 = vmatprep.subr.bf16.mxu0 0
        %501 = vmatpush1.bf16.msra.mxu0 %v461
        %502 = vmatprep.subr.bf16.mxu0 0
        %503 = vmatpush1.bf16.msra.mxu0 %v462
        %504 = vmatprep.subr.bf16.mxu0 0
        %505 = vmatpush1.bf16.msra.mxu0 %v463
        %506 = vmatprep.subr.bf16.mxu0 0
        %507 = vmatpush1.bf16.msra.mxu0 %v464
        %508 = vmatprep.subr.bf16.mxu0 0
        %509 = vmatpush1.bf16.msra.mxu0 %v465
        %510 = vmatprep.subr.bf16.mxu0 0
        %511 = vmatpush1.bf16.msra.mxu0 %v466
        %512 = vmatprep.subr.bf16.mxu0 0
        %513 = vmatpush1.bf16.msra.mxu0 %v467
        %514 = vmatprep.subr.bf16.mxu0 0
        %515 = vmatpush1.bf16.msra.mxu0 %v468
        %516 = vmatprep.subr.bf16.mxu0 0
        %517 = vmatpush1.bf16.msra.mxu0 %v469
        %518 = vmatprep.mubr.bf16.mxu0 %v387
        %519 = vmatmul.mubr.bf16.gmra.mrb[0].mxu0 %v386
        %v520 = vpop.f32.mrb[0].mxu0
        %v521 = vadd.f32 0.0, %v520
        %v522 = vpop.f32.mrb[0].mxu0
        %v523 = vpop.f32.mrb[0].mxu0
        %v524 = vadd.f32 0.0, %v523
        %v525 = vpop.f32.mrb[0].mxu0
        %526 = vdwg.mxu0
        %v527 = vld [vmem:[#allocation7] sm:$0xf]
        %v528 = vld [vmem:[#allocation7 + $0x4] sm:$0xf]
        %v529 = vpack.c.bf16 %v524, %v521
        %v530 = vld [vmem:[#allocation8] sm:$0xff]
        %v531 = vld [vmem:[#allocation8 + $0x8] sm:$0xff]
        %533 = vset.pattern.permute.xlu0 0
        %534 = vperm.xlu0 %533, %v530
        %v535 = vpop.permute.xlu0 %534
        %538 = vset.pattern.permute.xlu0 0
        %539 = vperm.xlu0 %538, %v531
        %v540 = vpop.permute.xlu0 %539
        %v544 = vunpack.c.l.b16 %v527
        %v545 = vunpack.c.l.b16 %v528
        %v546 = vpack.c.b16 %v545, %v544
        %vm547 = vcmask 130048
        %v549 = vsel %vm547, %v546, 0
        %551 = vmatprep.subr.bf16.mxu0 0
        %552 = vmatpush1.bf16.msra.mxu0 %v529
        %553 = vmatprep.subr.bf16.mxu0 0
        %554 = vmatpush1.bf16.msra.mxu0 0
        %555 = vmatprep.subr.bf16.mxu0 0
        %556 = vmatpush1.bf16.msra.mxu0 0
        %557 = vmatprep.subr.bf16.mxu0 0
        %558 = vmatpush1.bf16.msra.mxu0 0
        %559 = vmatprep.subr.bf16.mxu0 0
        %560 = vmatpush1.bf16.msra.mxu0 0
        %561 = vmatprep.subr.bf16.mxu0 0
        %562 = vmatpush1.bf16.msra.mxu0 0
        %563 = vmatprep.subr.bf16.mxu0 0
        %564 = vmatpush1.bf16.msra.mxu0 0
        %565 = vmatprep.subr.bf16.mxu0 0
        %566 = vmatpush1.bf16.msra.mxu0 0
        %567 = vmatprep.subr.bf16.mxu0 0
        %568 = vmatpush1.bf16.msra.mxu0 0
        %569 = vmatprep.subr.bf16.mxu0 0
        %570 = vmatpush1.bf16.msra.mxu0 0
        %571 = vmatprep.subr.bf16.mxu0 0
        %572 = vmatpush1.bf16.msra.mxu0 0
        %573 = vmatprep.subr.bf16.mxu0 0
        %574 = vmatpush1.bf16.msra.mxu0 0
        %575 = vmatprep.subr.bf16.mxu0 0
        %576 = vmatpush1.bf16.msra.mxu0 0
        %577 = vmatprep.subr.bf16.mxu0 0
        %578 = vmatpush1.bf16.msra.mxu0 0
        %579 = vmatprep.subr.bf16.mxu0 0
        %580 = vmatpush1.bf16.msra.mxu0 0
        %581 = vmatprep.subr.bf16.mxu0 0
        %582 = vmatpush1.bf16.msra.mxu0 0
        %583 = vmatprep.mubr.bf16.mxu0 0
        %584 = vmatmul.mubr.bf16.gmra.mrb[0].mxu0 %v549
        %v585 = vpop.f32.mrb[0].mxu0
        %v586 = vadd.f32 %v535, %v585
        %v587 = vpop.f32.mrb[0].mxu0
        %v588 = vpop.f32.mrb[0].mxu0
        %v589 = vadd.f32 %v540, %v588
        %v590 = vpop.f32.mrb[0].mxu0
        %591 = vdwg.mxu0
        %v592 = vmax.f32 %v586, 0.0
        %v593 = vmax.f32 %v589, 0.0
        %v594 = vld [vmem:[#allocation10] sm:$0xff]
        %v595 = vld [vmem:[#allocation10 + $0x8] sm:$0xff]
        %v596 = vmul.f32 %v592, %v594
        %v597 = vmul.f32 %v593, %v595
        %v598 = vpack.c.bf16 %v597, %v596
        %v599 = vld [vmem:[#allocation11] sm:$0xff]
        %v600 = vld [vmem:[#allocation11 + $0x8] sm:$0xff]
        %v601 = vld [vmem:[#allocation11 + $0x10] sm:$0xff]
        %v602 = vld [vmem:[#allocation11 + $0x18] sm:$0xff]
        %v603 = vld [vmem:[#allocation11 + $0x20] sm:$0xff]
        %v604 = vld [vmem:[#allocation11 + $0x28] sm:$0xff]
        %v605 = vld [vmem:[#allocation11 + $0x30] sm:$0xff]
        %v606 = vld [vmem:[#allocation11 + $0x38] sm:$0xff]
        %v607 = vld [vmem:[#allocation11 + $0x40] sm:$0xff]
        %v608 = vld [vmem:[#allocation11 + $0x48] sm:$0xff]
        %v609 = vld [vmem:[#allocation11 + $0x50] sm:$0xff]
        %v610 = vld [vmem:[#allocation11 + $0x58] sm:$0xff]
        %v611 = vld [vmem:[#allocation11 + $0x60] sm:$0xff]
        %v612 = vld [vmem:[#allocation11 + $0x68] sm:$0xff]
        %v613 = vld [vmem:[#allocation11 + $0x70] sm:$0xff]
        %v614 = vld [vmem:[#allocation11 + $0x78] sm:$0xff]
        %v631 = vunpack.c.l.b16 %v599
        %v632 = vunpack.c.h.b16 %v599
        %v633 = vunpack.c.l.b16 %v600
        %v634 = vunpack.c.h.b16 %v600
        %v635 = vunpack.c.l.b16 %v601
        %v636 = vunpack.c.h.b16 %v601
        %v637 = vunpack.c.l.b16 %v602
        %v638 = vunpack.c.h.b16 %v602
        %v639 = vunpack.c.l.b16 %v603
        %v640 = vunpack.c.h.b16 %v603
        %v641 = vunpack.c.l.b16 %v604
        %v642 = vunpack.c.h.b16 %v604
        %v643 = vunpack.c.l.b16 %v605
        %v644 = vunpack.c.h.b16 %v605
        %v645 = vunpack.c.l.b16 %v606
        %v646 = vunpack.c.h.b16 %v606
        %v647 = vunpack.c.l.b16 %v607
        %v648 = vunpack.c.h.b16 %v607
        %v649 = vunpack.c.l.b16 %v608
        %v650 = vunpack.c.h.b16 %v608
        %v651 = vunpack.c.l.b16 %v609
        %v652 = vunpack.c.h.b16 %v609
        %v653 = vunpack.c.l.b16 %v610
        %v654 = vunpack.c.h.b16 %v610
        %v655 = vunpack.c.l.b16 %v611
        %v656 = vunpack.c.h.b16 %v611
        %v657 = vunpack.c.l.b16 %v612
        %v658 = vunpack.c.h.b16 %v612
        %v659 = vunpack.c.l.b16 %v613
        %v660 = vunpack.c.h.b16 %v613
        %v661 = vunpack.c.l.b16 %v614
        %v662 = vunpack.c.h.b16 %v614
        %v663 = vpack.c.b16 %v633, %v631
        %v664 = vpack.c.b16 %v634, %v632
        %v665 = vpack.c.b16 %v637, %v635
        %v666 = vpack.c.b16 %v638, %v636
        %v667 = vpack.c.b16 %v641, %v639
        %v668 = vpack.c.b16 %v642, %v640
        %v669 = vpack.c.b16 %v645, %v643
        %v670 = vpack.c.b16 %v646, %v644
        %v671 = vpack.c.b16 %v649, %v647
        %v672 = vpack.c.b16 %v650, %v648
        %v673 = vpack.c.b16 %v653, %v651
        %v674 = vpack.c.b16 %v654, %v652
        %v675 = vpack.c.b16 %v657, %v655
        %v676 = vpack.c.b16 %v658, %v656
        %v677 = vpack.c.b16 %v661, %v659
        %v678 = vpack.c.b16 %v662, %v660
        %695 = vmatprep.subr.bf16.mxu0 %v664
        %696 = vmatpush1.bf16.msra.mxu0 %v663
        %697 = vmatprep.subr.bf16.mxu0 %v666
        %698 = vmatpush1.bf16.msra.mxu0 %v665
        %699 = vmatprep.subr.bf16.mxu0 %v668
        %700 = vmatpush1.bf16.msra.mxu0 %v667
        %701 = vmatprep.subr.bf16.mxu0 %v670
        %702 = vmatpush1.bf16.msra.mxu0 %v669
        %703 = vmatprep.subr.bf16.mxu0 %v672
        %704 = vmatpush1.bf16.msra.mxu0 %v671
        %705 = vmatprep.subr.bf16.mxu0 %v674
        %706 = vmatpush1.bf16.msra.mxu0 %v673
        %707 = vmatprep.subr.bf16.mxu0 %v676
        %708 = vmatpush1.bf16.msra.mxu0 %v675
        %709 = vmatprep.subr.bf16.mxu0 %v678
        %710 = vmatpush1.bf16.msra.mxu0 %v677
        %711 = vmatprep.subr.bf16.mxu0 0
        %712 = vmatpush1.bf16.msra.mxu0 0
        %713 = vmatprep.subr.bf16.mxu0 0
        %714 = vmatpush1.bf16.msra.mxu0 0
        %715 = vmatprep.subr.bf16.mxu0 0
        %716 = vmatpush1.bf16.msra.mxu0 0
        %717 = vmatprep.subr.bf16.mxu0 0
        %718 = vmatpush1.bf16.msra.mxu0 0
        %719 = vmatprep.subr.bf16.mxu0 0
        %720 = vmatpush1.bf16.msra.mxu0 0
        %721 = vmatprep.subr.bf16.mxu0 0
        %722 = vmatpush1.bf16.msra.mxu0 0
        %723 = vmatprep.subr.bf16.mxu0 0
        %724 = vmatpush1.bf16.msra.mxu0 0
        %725 = vmatprep.subr.bf16.mxu0 0
        %726 = vmatpush1.bf16.msra.mxu0 0
        %727 = vmatprep.mubr.bf16.mxu0 0
        %728 = vmatmul.mubr.bf16.gmra.mrb[0].mxu0 %v598
        %v729 = vpop.f32.mrb[0].mxu0
        %v730 = vadd.f32 0.0, %v729
        %v731 = vpop.f32.mrb[0].mxu0
        %v732 = vadd.f32 0.0, %v731
        %v733 = vpop.f32.mrb[0].mxu0
        %v734 = vadd.f32 0.0, %v733
        %v735 = vpop.f32.mrb[0].mxu0
        %v736 = vadd.f32 0.0, %v735
        %737 = vdwg.mxu0
        %v738 = vpack.c.bf16 %v734, %v730
        %v739 = vpack.c.bf16 %v736, %v732
        %v742 = vunpack.c.l.b16 %v738
        %v743 = vunpack.c.l.b16 %v739
        %v744 = vunpack.c.h.b16 %v738
        %v745 = vunpack.c.h.b16 %v739
        %v746 = vpack.c.b16 %v743, %v742
        %v747 = vpack.c.b16 %v745, %v744
        %750 = vst [vmem:[%s342 + $0x10] sm:$0xff] %v746
        %751 = vst [vmem:[%s342 + $0x18] sm:$0xff] %v747
        %s752 = sand.u32 %s165, 1
        %s753 = scalar_lea.sflag [#allocation4], %s752
        %s754 = sand.u32 %s165, 1
        %s755 = smul.addr %s754, 32
        %s756 = scalar_lea.vmem [#allocation13], %s755
        // Predicated region
        $region69: #{tpu_custom_call.1} parent=43 // pred_check
          %p757 = pneg %p175
        $region70: #{tpu_custom_call.1} parent=43 // pred_check_branch
          %759 = sbr.rel (%p757) target = $region72
        $region71: #{tpu_custom_call.1} parent=43 // pred_region
          %s761 = ssub.s32 512, 512
          %762 = vsyncadd %s753, %s761
          %s763 = smul.addr %s26, 8
          %s764 = smul.addr %s763, 64
          %s765 = scalar_lea.hbm %s6, %s764
          %s766 = sshll.u32 %s756, 4
          %s767 = int_to_ptr.vmem [resolvable:$true] %s766
          %772 = dma.vmem_to_hbm [thread:$0]  %s767, 512, %s765, %s753, 128, 128, 8
        $region72: #{tpu_custom_call.1} parent=43 // pred_fallthru
          _
      $region44: #{tpu_custom_call.1} parent=5 // pred_fallthru
        _
      %p773 = scmp.le.s32.totalorder 2, %s21
      // Predicated region
      $region73: #{tpu_custom_call.1} parent=5 // pred_check
        %p774 = pneg %p773
      $region74: #{tpu_custom_call.1} parent=5 // pred_check_branch
        %776 = sbr.rel (%p774) target = $region76
      $region75: #{tpu_custom_call.1} parent=5 // pred_region
        %s777 = ssub.s32 %s21, 2
        // Predicated region
        $region77: #{tpu_custom_call.1} parent=75 // pred_check
          %p778 = pneg %p181
        $region78: #{tpu_custom_call.1} parent=75 // pred_check_branch
          %780 = sbr.rel (%p778) target = $region80
        $region79: #{tpu_custom_call.1} parent=75 // pred_region
          %s781 = sand.u32 %s166, 1
          %s782 = scalar_lea.sflag [#allocation4], %s781
          %s783 = sand.u32 %s166, 1
          %s784 = smul.addr %s783, 32
          %s785 = scalar_lea.vmem [#allocation13], %s784
          %786 = dma.done %s782, 512
        $region80: #{tpu_custom_call.1} parent=75 // pred_fallthru
          _
      $region76: #{tpu_custom_call.1} parent=5 // pred_fallthru
        _
    $region6: #{tpu_custom_call.1} parent=1 // loop_footer
      %s25 = sadd.s32 1, %s21
    $region7: #{tpu_custom_call.1} parent=1 // loop_footer_branch
      %20 = sbr.rel target = $region3
    $region8: #{tpu_custom_call.1} parent=1 // loop_exit
      _
    %787 = vsyncpa [#allocation3], 1
    %s788 = scalar_lea.sflag [#allocation3], 1
    %789 = vsyncpa %s788, 1
    %790 = vsyncpa [#allocation6], 1
    %791 = vsyncpa [#allocation9], 1
    %792 = vsyncpa [#allocation12], 1
    %793 = vsyncpa [#allocation4], 1
    %s794 = scalar_lea.sflag [#allocation4], 1
    %795 = vsyncpa %s794, 1

</llo_original>
